<compile_context>
chip_gen: v7x
topology: tpu7x:2x2x1
jax: 0.10.0
libtpu: 0.0.40
codegen_flags: <defaults>
</compile_context>

<pallas_src>
import functools

import jax
import jax.numpy as jnp
from jax.experimental import pallas as pl
from jax.experimental.pallas import tpu as pltpu


def dual_attention_kernel(x_ref, w1_ref, b1_ref, w2_ref, b2_ref,
                          wsp_ref, bsp_ref, o_ref, *, inv_hw):
    bn, c, hw = x_ref.shape
    c16 = w1_ref.shape[0]

    x = x_ref[...]                                              # (bn, C, HW) f32

    # Broadcast the tiny shared weights across the bn batch slices of this tile
    # so every contraction below is one standard batched matmul (proven
    # lowering pattern), instead of bn separate small matmuls.
    w1 = jnp.broadcast_to(w1_ref[...][None], (bn, c16, c))      # (bn, C//16, C)
    w2 = jnp.broadcast_to(w2_ref[...][None], (bn, c, c16))      # (bn, C,    C//16)
    wsp = jnp.broadcast_to(wsp_ref[...][None], (bn, 1, c))      # (bn, 1,    C)

    # ---- channel attention: global avg pool + 2 x (1x1 conv) ----
    # sum over the lane (HW) axis, normalized by the true H*W.
    avg = jnp.sum(x, axis=2, keepdims=True) * inv_hw            # (bn, C, 1)
    z1 = jnp.einsum('bkc,bco->bko', w1, avg,
                    preferred_element_type=jnp.float32) + b1_ref[...]   # (bn, C//16, 1)
    z1 = jnp.maximum(z1, 0.0)                                   # ReLU
    z2 = jnp.einsum('bck,bko->bco', w2, z1,
                    preferred_element_type=jnp.float32) + b2_ref[...]   # (bn, C, 1)
    ch = jax.nn.sigmoid(z2)                                     # (bn, C, 1)

    # ---- spatial attention: 1x1 conv to a single channel ----
    s = jnp.einsum('boc,bcs->bos', wsp, x,
                   preferred_element_type=jnp.float32) + bsp_ref[...]   # (bn, 1, HW)
    sp = jax.nn.sigmoid(s)                                      # (bn, 1, HW)

    # ---- fused combine: x*ch + x*sp == x*(ch + sp) ----
    o_ref[...] = x * (ch + sp)


def _budgets():
    """(tile_budget_bytes, vmem_limit_cap_bytes) — generation aware."""
    cap = None
    try:
        cap = int(pltpu.get_tpu_info().vmem_capacity_bytes)
    except Exception:
        cap = None
    if cap is not None and cap >= (96 << 20):
        # v5e / v6e: 128 MiB VMEM — bigger tiles, fewer grid steps.
        return 16 << 20, 112 << 20
    # v7x (64 MiB VMEM) or unknown: stay conservative.
    return 8 << 20, 56 << 20


def _pick_block_n(n, c, hw, *, tile_budget_bytes, block_n=None, itemsize=4):
    """Batch elements per grid step; always a divisor of n => no batch padding."""
    per_batch = max(1, c * hw * itemsize)
    if block_n is not None:
        bn = int(block_n)
    else:
        bn = max(1, tile_budget_bytes // per_batch)
        # >= 4 grid steps when the batch allows: >= 2 steps per v7x TensorCore,
        # and enough steps for BlockSpec double-buffering to hide DMA everywhere.
        bn = min(bn, n // 4) if n >= 4 else 1
    bn = max(1, min(bn, n))
    while n % bn:                       # largest divisor of n not exceeding bn
        bn -= 1
    return int(bn)


def dual_attention(x_nchw, params, *, block_n=None):
    """x_nchw: (N, C, H, W) float32. params: dict of weights (see init_params)."""
    n, c, h, w = x_nchw.shape
    hw = h * w
    x = x_nchw.reshape(n, c, hw)        # contiguous reshape: no HBM copy

    tile_budget, vmem_cap = _budgets()
    bn = _pick_block_n(n, c, hw, tile_budget_bytes=tile_budget, block_n=block_n)
    grid = (n // bn,)

    w1, b1, w2, b2, wsp, bsp = (params["w1"], params["b1"], params["w2"],
                                params["b2"], params["wsp"], params["bsp"])
    c16 = w1.shape[0]

    # VMEM estimate: double-buffered in + out (4x tile), slack for one fused
    # broadcast temporary (+2x tile), resident weights + their bn-broadcasts.
    tile_bytes = bn * c * hw * 4
    weight_bytes = 4 * (2 * c16 * c + c16 + 2 * c + 1)
    bcast_bytes = 4 * bn * (2 * c16 * c + c)
    vmem_limit = int(min(vmem_cap,
                         max(32 << 20,
                             6 * tile_bytes + weight_bytes + bcast_bytes + (4 << 20))))

    const = lambda shape: pl.BlockSpec(shape, lambda i: (0,) * len(shape))
    kernel = functools.partial(dual_attention_kernel, inv_hw=1.0 / hw)

    out = pl.pallas_call(
        kernel,
        out_shape=jax.ShapeDtypeStruct((n, c, hw), jnp.float32),
        grid_spec=pltpu.PrefetchScalarGridSpec(
            num_scalar_prefetch=0,
            grid=grid,
            in_specs=[
                pl.BlockSpec((bn, c, hw), lambda i: (i, 0, 0)),  # x tile
                const((c16, c)),                                 # W1  (C//16, C)
                const((c16, 1)),                                 # b1
                const((c, c16)),                                 # W2  (C, C//16)
                const((c, 1)),                                   # b2
                const((1, c)),                                   # Wsp (1, C)
                const((1, 1)),                                   # bsp
            ],
            out_specs=pl.BlockSpec((bn, c, hw), lambda i: (i, 0, 0)),
        ),
        compiler_params=pltpu.CompilerParams(
            dimension_semantics=("parallel",),
            vmem_limit_bytes=vmem_limit),
    )(x, w1, b1, w2, b2, wsp, bsp)

    return out.reshape(n, c, h, w)


def init_params(key, in_ch):
    """Deterministic synthetic init matching nn.Conv2d(_, _, 1) shapes."""
    c16 = in_ch // 16
    k1, k2, k3, k4, k5, k6 = jax.random.split(key, 6)
    return {
        # Conv2d(in_ch, in_ch//16, 1): weight (c16, in_ch, 1, 1) -> (c16, in_ch)
        "w1": 0.1 * jax.random.normal(k1, (c16, in_ch), jnp.float32),
        "b1": 0.1 * jax.random.normal(k2, (c16, 1), jnp.float32),
        # Conv2d(in_ch//16, in_ch, 1): weight (in_ch, c16, 1, 1) -> (in_ch, c16)
        "w2": 0.1 * jax.random.normal(k3, (in_ch, c16), jnp.float32),
        "b2": 0.1 * jax.random.normal(k4, (in_ch, 1), jnp.float32),
        # Conv2d(in_ch, 1, 1): weight (1, in_ch, 1, 1) -> (1, in_ch)
        "wsp": 0.1 * jax.random.normal(k5, (1, in_ch), jnp.float32),
        "bsp": 0.1 * jax.random.normal(k6, (1, 1), jnp.float32),
    }


def dual_attention_ref(x, p):
    """Pure-JAX reference of the PyTorch forward (NCHW)."""
    avg = jnp.mean(x, axis=(2, 3))                                   # (N, C)
    z1 = jnp.maximum(avg @ p["w1"].T + p["b1"][:, 0], 0.0)           # (N, C//16)
    ch = jax.nn.sigmoid(z1 @ p["w2"].T + p["b2"][:, 0])              # (N, C)
    sp = jax.nn.sigmoid(
        jnp.einsum("nchw,c->nhw", x, p["wsp"][0]) + p["bsp"][0, 0])  # (N, H, W)
    return x * ch[:, :, None, None] + x * sp[:, None, :, :]


if __name__ == "__main__":
    key = jax.random.PRNGKey(0)
    kx, kp, kx2, kx3 = jax.random.split(key, 4)

    # in_ch must be >= 16 so that in_ch // 16 >= 1 (as in the PyTorch module).
    N, C, H, W = 2, 32, 16, 16
    x = jax.random.normal(kx, (N, C, H, W), jnp.float32)
    params = init_params(kp, C)

    out = jax.block_until_ready(dual_attention(x, params))
    ref = dual_attention_ref(x, params)
    assert out.shape == (N, C, H, W)
    assert jnp.allclose(out, ref, atol=1e-4, rtol=1e-4), "mismatch vs reference"

    # Ragged spatial (14x14 = 196 lanes, not a 128 multiple) + odd batch:
    # no padding or slicing anywhere (block last dims == full array dims).
    x2 = jax.random.normal(kx2, (3, C, 14, 14), jnp.float32)
    out2 = jax.block_until_ready(dual_attention(x2, params))
    ref2 = dual_attention_ref(x2, params)
    assert out2.shape == (3, C, 14, 14)
    assert jnp.allclose(out2, ref2, atol=1e-4, rtol=1e-4), "mismatch (ragged case)"

    # bn > 1 path: batched compute over 2 batch elements per grid step.
    x3 = jax.random.normal(kx3, (4, C, 8, 8), jnp.float32)
    out3 = jax.block_until_ready(dual_attention(x3, params, block_n=2))
    ref3 = dual_attention_ref(x3, params)
    assert out3.shape == (4, C, 8, 8)
    assert jnp.allclose(out3, ref3, atol=1e-4, rtol=1e-4), "mismatch (bn>1 case)"

    print("KERNEL_OK")
</pallas_src>

<mosaic_0001>
module attributes {stable_mosaic.version = 11 : i64} {
  func.func @dual_attention_kernel(%arg0: i32, %arg1: memref<1x32x256xf32, #tpu.memory_space<vmem>>, %arg2: memref<2x32xf32, #tpu.memory_space<vmem>>, %arg3: memref<2x1xf32, #tpu.memory_space<vmem>>, %arg4: memref<32x2xf32, #tpu.memory_space<vmem>>, %arg5: memref<32x1xf32, #tpu.memory_space<vmem>>, %arg6: memref<1x32xf32, #tpu.memory_space<vmem>>, %arg7: memref<1x1xf32, #tpu.memory_space<vmem>>, %arg8: memref<1x32x256xf32, #tpu.memory_space<vmem>>) attributes {dimension_semantics = [#tpu.dimension_semantics<parallel>], iteration_bounds = array<i64: 2>, scalar_prefetch = 0 : i64, scratch_operands = 0 : i64, tpu.core_type = #tpu.core_type<tc>, window_params = [{transform_indices = @transform_0, window_bounds = array<i64: 1, 32, 256>}, {pipeline_mode = #tpu.pipeline_mode<synchronous>, transform_indices = @transform_1, window_bounds = array<i64: 2, 32>}, {pipeline_mode = #tpu.pipeline_mode<synchronous>, transform_indices = @transform_2, window_bounds = array<i64: 2, 1>}, {pipeline_mode = #tpu.pipeline_mode<synchronous>, transform_indices = @transform_3, window_bounds = array<i64: 32, 2>}, {pipeline_mode = #tpu.pipeline_mode<synchronous>, transform_indices = @transform_4, window_bounds = array<i64: 32, 1>}, {pipeline_mode = #tpu.pipeline_mode<synchronous>, transform_indices = @transform_5, window_bounds = array<i64: 1, 32>}, {pipeline_mode = #tpu.pipeline_mode<synchronous>, transform_indices = @transform_6, window_bounds = array<i64: 1, 1>}, {transform_indices = @transform_7, window_bounds = array<i64: 1, 32, 256>}]} {
    %c0 = arith.constant 0 : index
    %c0_0 = arith.constant 0 : index
    %c0_1 = arith.constant 0 : index
    %0 = vector.load %arg1[%c0, %c0_0, %c0_1] : memref<1x32x256xf32, #tpu.memory_space<vmem>>, vector<1x32x256xf32>
    %c0_2 = arith.constant 0 : index
    %c0_3 = arith.constant 0 : index
    %1 = vector.load %arg2[%c0_2, %c0_3] : memref<2x32xf32, #tpu.memory_space<vmem>>, vector<2x32xf32>
    %2 = vector.shape_cast %1 : vector<2x32xf32> to vector<1x2x32xf32>
    %c0_4 = arith.constant 0 : index
    %c0_5 = arith.constant 0 : index
    %3 = vector.load %arg4[%c0_4, %c0_5] : memref<32x2xf32, #tpu.memory_space<vmem>>, vector<32x2xf32>
    %4 = vector.shape_cast %3 : vector<32x2xf32> to vector<1x32x2xf32>
    %c0_6 = arith.constant 0 : index
    %c0_7 = arith.constant 0 : index
    %5 = vector.load %arg6[%c0_6, %c0_7] : memref<1x32xf32, #tpu.memory_space<vmem>>, vector<1x32xf32>
    %6 = vector.shape_cast %5 : vector<1x32xf32> to vector<1x1x32xf32>
    %cst = arith.constant dense<0.000000e+00> : vector<1x32xf32>
    %7 = vector.multi_reduction <add>, %0, %cst [2] : vector<1x32x256xf32> to vector<1x32xf32>
    %8 = vector.shape_cast %7 : vector<1x32xf32> to vector<1x32x1xf32>
    %cst_8 = arith.constant 3.906250e-03 : f32
    %9 = vector.broadcast %cst_8 : f32 to vector<1x32x1xf32>
    %10 = arith.mulf %8, %9 : vector<1x32x1xf32>
    "tpu.trace_start"() <{level = 10 : i32, message = "bkc,bco->bko"}> : () -> ()
    %cst_9 = arith.constant dense<0.000000e+00> : vector<1x2x1xf32>
    %11 = tpu.matmul %2, %10, %cst_9 {dimension_numbers = #tpu.dot_dimension_numbers<[2], [1], [1], [2], [0, 0, 0, 1, 1, 2], [0], [0]>} : vector<1x2x32xf32>, vector<1x32x1xf32>, vector<1x2x1xf32> -> vector<1x2x1xf32>
    "tpu.trace_stop"() : () -> ()
    %c0_10 = arith.constant 0 : index
    %c0_11 = arith.constant 0 : index
    %12 = vector.load %arg3[%c0_10, %c0_11] : memref<2x1xf32, #tpu.memory_space<vmem>>, vector<2x1xf32>
    %13 = vector.shape_cast %12 : vector<2x1xf32> to vector<1x2x1xf32>
    %14 = arith.addf %11, %13 : vector<1x2x1xf32>
    %cst_12 = arith.constant 0.000000e+00 : f32
    %15 = vector.broadcast %cst_12 : f32 to vector<1x2x1xf32>
    %16 = arith.maximumf %14, %15 : vector<1x2x1xf32>
    "tpu.trace_start"() <{level = 10 : i32, message = "bck,bko->bco"}> : () -> ()
    %cst_13 = arith.constant dense<0.000000e+00> : vector<1x32x1xf32>
    %17 = tpu.matmul %4, %16, %cst_13 {dimension_numbers = #tpu.dot_dimension_numbers<[2], [1], [1], [2], [0, 0, 0, 1, 1, 2], [0], [0]>} : vector<1x32x2xf32>, vector<1x2x1xf32>, vector<1x32x1xf32> -> vector<1x32x1xf32>
    "tpu.trace_stop"() : () -> ()
    %c0_14 = arith.constant 0 : index
    %c0_15 = arith.constant 0 : index
    %18 = vector.load %arg5[%c0_14, %c0_15] : memref<32x1xf32, #tpu.memory_space<vmem>>, vector<32x1xf32>
    %19 = vector.shape_cast %18 : vector<32x1xf32> to vector<1x32x1xf32>
    %20 = arith.addf %17, %19 : vector<1x32x1xf32>
    %21 = arith.negf %20 : vector<1x32x1xf32>
    %22 = math.exp %21 : vector<1x32x1xf32>
    %cst_16 = arith.constant 1.000000e+00 : f32
    %23 = vector.broadcast %cst_16 : f32 to vector<1x32x1xf32>
    %24 = arith.addf %23, %22 : vector<1x32x1xf32>
    %25 = arith.divf %23, %24 : vector<1x32x1xf32>
    "tpu.trace_start"() <{level = 10 : i32, message = "boc,bcs->bos"}> : () -> ()
    %cst_17 = arith.constant dense<0.000000e+00> : vector<1x1x256xf32>
    %26 = tpu.matmul %6, %0, %cst_17 {dimension_numbers = #tpu.dot_dimension_numbers<[2], [1], [1], [2], [0, 0, 0, 1, 1, 2], [0], [0]>} : vector<1x1x32xf32>, vector<1x32x256xf32>, vector<1x1x256xf32> -> vector<1x1x256xf32>
    "tpu.trace_stop"() : () -> ()
    %c0_18 = arith.constant 0 : index
    %c0_19 = arith.constant 0 : index
    %27 = vector.load %arg7[%c0_18, %c0_19] : memref<1x1xf32, #tpu.memory_space<vmem>>, vector<1x1xf32>
    %28 = vector.shape_cast %27 : vector<1x1xf32> to vector<1x1x1xf32>
    %29 = vector.broadcast %28 : vector<1x1x1xf32> to vector<1x1x256xf32>
    %30 = arith.addf %26, %29 : vector<1x1x256xf32>
    %31 = arith.negf %30 : vector<1x1x256xf32>
    %32 = math.exp %31 : vector<1x1x256xf32>
    %cst_20 = arith.constant 1.000000e+00 : f32
    %33 = vector.broadcast %cst_20 : f32 to vector<1x1x256xf32>
    %34 = arith.addf %33, %32 : vector<1x1x256xf32>
    %35 = arith.divf %33, %34 : vector<1x1x256xf32>
    %36 = vector.broadcast %25 : vector<1x32x1xf32> to vector<1x32x256xf32>
    %37 = vector.broadcast %35 : vector<1x1x256xf32> to vector<1x32x256xf32>
    %38 = arith.addf %36, %37 : vector<1x32x256xf32>
    %39 = arith.mulf %0, %38 : vector<1x32x256xf32>
    %c0_21 = arith.constant 0 : index
    %c0_22 = arith.constant 0 : index
    %c0_23 = arith.constant 0 : index
    %40 = vector.load %arg8[%c0_21, %c0_22, %c0_23] : memref<1x32x256xf32, #tpu.memory_space<vmem>>, vector<1x32x256xf32>
    tpu.vector_store %arg8[%c0_21, %c0_22, %c0_23], %39 {strides = array<i32>} : memref<1x32x256xf32, #tpu.memory_space<vmem>>, vector<1x32x256xf32>,
    return
  }
  func.func @transform_0(%arg0: i32) -> (i32, i32, i32) {
    %c0_i32 = arith.constant 0 : i32
    %c0_i32_0 = arith.constant 0 : i32
    %c0_i32_1 = arith.constant 0 : i32
    return %arg0, %c0_i32, %c0_i32_0 : i32, i32, i32
  }
  func.func @transform_1(%arg0: i32) -> (i32, i32) {
    %c0_i32 = arith.constant 0 : i32
    %c0_i32_0 = arith.constant 0 : i32
    %c0_i32_1 = arith.constant 0 : i32
    return %c0_i32, %c0_i32_0 : i32, i32
  }
  func.func @transform_2(%arg0: i32) -> (i32, i32) {
    %c0_i32 = arith.constant 0 : i32
    %c0_i32_0 = arith.constant 0 : i32
    %c0_i32_1 = arith.constant 0 : i32
    return %c0_i32, %c0_i32_0 : i32, i32
  }
  func.func @transform_3(%arg0: i32) -> (i32, i32) {
    %c0_i32 = arith.constant 0 : i32
    %c0_i32_0 = arith.constant 0 : i32
    %c0_i32_1 = arith.constant 0 : i32
    return %c0_i32, %c0_i32_0 : i32, i32
  }
  func.func @transform_4(%arg0: i32) -> (i32, i32) {
    %c0_i32 = arith.constant 0 : i32
    %c0_i32_0 = arith.constant 0 : i32
    %c0_i32_1 = arith.constant 0 : i32
    return %c0_i32, %c0_i32_0 : i32, i32
  }
  func.func @transform_5(%arg0: i32) -> (i32, i32) {
    %c0_i32 = arith.constant 0 : i32
    %c0_i32_0 = arith.constant 0 : i32
    %c0_i32_1 = arith.constant 0 : i32
    return %c0_i32, %c0_i32_0 : i32, i32
  }
  func.func @transform_6(%arg0: i32) -> (i32, i32) {
    %c0_i32 = arith.constant 0 : i32
    %c0_i32_0 = arith.constant 0 : i32
    %c0_i32_1 = arith.constant 0 : i32
    return %c0_i32, %c0_i32_0 : i32, i32
  }
  func.func @transform_7(%arg0: i32) -> (i32, i32, i32) {
    %c0_i32 = arith.constant 0 : i32
    %c0_i32_0 = arith.constant 0 : i32
    %c0_i32_1 = arith.constant 0 : i32
    return %arg0, %c0_i32, %c0_i32_0 : i32, i32, i32
  }
}

</mosaic_0001>

<llo_original>
// kernel: tpu_custom_call.1
$region0: #{tpu_custom_call.1}
  #allocation0 [shape = 'u32[]', space=smem, size = 0x4, offset = 0x4, fixed_abs, tag = 'smem constant byte address 0x4 - core index']
  #allocation1 [shape = 'u32[144,128]{1,0:T(1,128)}', space=vmem, size = 0x12000, scoped, tag = 'internal scratch']
  #allocation2 [shape = 'f32[1,1]{1,0:T(1,128)S(1)}', space=vmem, size = 0x200, scoped, tag = 'scoped memory for tpu_custom_call.1']
  %s0 = inlined_call_operand.hbm [shape: f32[2,32,256], index: 0, kind: input, shape index: {}]
  %s1 = inlined_call_operand.vmem [shape: f32[2,32], index: 1, kind: input, shape index: {}]
  %s2 = inlined_call_operand.vmem [shape: f32[2,1], index: 2, kind: input, shape index: {}]
  %s3 = inlined_call_operand.vmem [shape: f32[32,2], index: 3, kind: input, shape index: {}]
  %s4 = inlined_call_operand.vmem [shape: f32[32,1], index: 4, kind: input, shape index: {}]
  %s5 = inlined_call_operand.vmem [shape: f32[1,32], index: 5, kind: input, shape index: {}]
  %s6 = inlined_call_operand.<no memory space> [shape: f32[1,1], index: 6, kind: input, shape index: {}]
  %s7 = inlined_call_operand.hbm [shape: f32[2,32,256], index: 7, kind: output, shape index: {}]
  %s8 = sld [smem:[#allocation0]]
  $region65: #{tpu_custom_call.1} parent=0
    _
  %s10 = ssub.s32 1, %s8
  %s11 = scalar_select 0, %s10, %s8
  %v12 = vstv %s6
  %13 = vst [vmem:[#allocation2] sm:$0x1] %v12
  $region1: #{tpu_custom_call.1} parent=0
    #allocation3 [shape = 'u8[65536]{0}', space=vmem, size = 0x10000, scoped, tag = 'input window, operand 0']
    #allocation4 [shape = 's32[2]{0}', space=sflag, size = 0x8, scoped, tag = 'scoped memory for tpu_custom_call.1']
    #allocation5 [shape = 's32[2]{0}', space=sflag, size = 0x8, scoped, tag = 'scoped memory for tpu_custom_call.1']
    #allocation6 [shape = 'u8[65536]{0}', space=vmem, size = 0x10000, scoped, tag = 'output window, operand 0']
    %14 = vsyncpa [#allocation4], 0
    %s15 = scalar_lea.sflag [#allocation4], 1
    %16 = vsyncpa %s15, 0
    %17 = vsyncpa [#allocation5], 0
    %s18 = scalar_lea.sflag [#allocation5], 1
    %19 = vsyncpa %s18, 0
    loop: start=0, step=1, limit=4
    $region2: #{tpu_custom_call.1} parent=1 // loop_pre_header
      _
    $region3: #{tpu_custom_call.1} parent=1 // loop_header
      %s21 = sphi 0, %s25
      %p22 = scmp.ge.s32.totalorder %s21, 4
      %s31 = sphi 0, %s33
      %s34 = sphi 0, %s31
      %s35 = sphi 0, %s34
      %s51 = sphi 0, %s35
      %s55 = sphi 0, %s55
      %s57 = sphi 0, %s55
      %s58 = sphi 0, %s57
      %s72 = sphi 0, %s58
      %s76 = sphi 0, %s76
      %s78 = sphi 0, %s76
      %s79 = sphi 0, %s78
      %s93 = sphi 0, %s79
      %s97 = sphi 0, %s97
      %s99 = sphi 0, %s97
      %s100 = sphi 0, %s99
      %s114 = sphi 0, %s100
      %s118 = sphi 0, %s118
      %s120 = sphi 0, %s118
      %s121 = sphi 0, %s120
      %s135 = sphi 0, %s121
      %s139 = sphi 0, %s139
      %s141 = sphi 0, %s139
      %s142 = sphi 0, %s141
      %s156 = sphi 0, %s142
      %s160 = sphi 0, %s160
      %s162 = sphi 0, %s160
      %s163 = sphi 0, %s162
      %s177 = sphi 0, %s163
      %s183 = sphi 0, %s185
      %s186 = sphi 0, %s183
      %s187 = sphi 0, %s186
      %s203 = sphi 0, %s187
    $region4: #{tpu_custom_call.1} parent=1 // loop_header_branch
      %24 = sbr.rel (%p22) target = $region8
    $region5: #{tpu_custom_call.1} parent=1 // loop_body
      %s26 = ssub.s32 %s21, 1
      %s27 = ssub.s32 %s21, 2
      %s28 = sadd.s32 %s21, 1
      %s29 = ssub.s32 %s21, %s28
      %p30 = scmp.eq.s32.totalorder %s29, 0
      %s32 = sadd.s32 %s31, 1
      %s33 = scalar_select %p30, %s31, %s32
      %p36 = pneg %p30
      %p37 = scmp.eq.s32.totalorder %s21, 1
      %p38 = por %p36, %p37
      %p39 = scmp.ne.s32.totalorder %s31, %s34
      %p40 = scmp.eq.s32.totalorder %s21, 0
      %p41 = por %p39, %p40
      %p42 = scmp.ne.s32.totalorder %s31, %s34
      %p43 = scmp.eq.s32.totalorder %s26, 1
      %p44 = por %p42, %p43
      %p45 = scmp.ne.s32.totalorder %s34, %s35
      %p46 = scmp.eq.s32.totalorder %s26, 0
      %p47 = por %p45, %p46
      %p48 = scmp.ne.s32.totalorder %s34, %s35
      %p49 = scmp.eq.s32.totalorder %s27, 1
      %p50 = por %p48, %p49
      %p52 = scmp.ne.s32.totalorder %s35, %s51
      %p53 = scmp.eq.s32.totalorder %s27, 0
      %p54 = por %p52, %p53
      %s56 = sadd.s32 %s55, 1
      %p59 = scmp.eq.s32.totalorder %s21, 1
      %p60 = scmp.ne.s32.totalorder %s55, %s57
      %p61 = scmp.eq.s32.totalorder %s21, 0
      %p62 = por %p60, %p61
      %p63 = scmp.ne.s32.totalorder %s55, %s57
      %p64 = scmp.eq.s32.totalorder %s26, 1
      %p65 = por %p63, %p64
      %p66 = scmp.ne.s32.totalorder %s57, %s58
      %p67 = scmp.eq.s32.totalorder %s26, 0
      %p68 = por %p66, %p67
      %p69 = scmp.ne.s32.totalorder %s57, %s58
      %p70 = scmp.eq.s32.totalorder %s27, 1
      %p71 = por %p69, %p70
      %p73 = scmp.ne.s32.totalorder %s58, %s72
      %p74 = scmp.eq.s32.totalorder %s27, 0
      %p75 = por %p73, %p74
      %s77 = sadd.s32 %s76, 1
      %p80 = scmp.eq.s32.totalorder %s21, 1
      %p81 = scmp.ne.s32.totalorder %s76, %s78
      %p82 = scmp.eq.s32.totalorder %s21, 0
      %p83 = por %p81, %p82
      %p84 = scmp.ne.s32.totalorder %s76, %s78
      %p85 = scmp.eq.s32.totalorder %s26, 1
      %p86 = por %p84, %p85
      %p87 = scmp.ne.s32.totalorder %s78, %s79
      %p88 = scmp.eq.s32.totalorder %s26, 0
      %p89 = por %p87, %p88
      %p90 = scmp.ne.s32.totalorder %s78, %s79
      %p91 = scmp.eq.s32.totalorder %s27, 1
      %p92 = por %p90, %p91
      %p94 = scmp.ne.s32.totalorder %s79, %s93
      %p95 = scmp.eq.s32.totalorder %s27, 0
      %p96 = por %p94, %p95
      %s98 = sadd.s32 %s97, 1
      %p101 = scmp.eq.s32.totalorder %s21, 1
      %p102 = scmp.ne.s32.totalorder %s97, %s99
      %p103 = scmp.eq.s32.totalorder %s21, 0
      %p104 = por %p102, %p103
      %p105 = scmp.ne.s32.totalorder %s97, %s99
      %p106 = scmp.eq.s32.totalorder %s26, 1
      %p107 = por %p105, %p106
      %p108 = scmp.ne.s32.totalorder %s99, %s100
      %p109 = scmp.eq.s32.totalorder %s26, 0
      %p110 = por %p108, %p109
      %p111 = scmp.ne.s32.totalorder %s99, %s100
      %p112 = scmp.eq.s32.totalorder %s27, 1
      %p113 = por %p111, %p112
      %p115 = scmp.ne.s32.totalorder %s100, %s114
      %p116 = scmp.eq.s32.totalorder %s27, 0
      %p117 = por %p115, %p116
      %s119 = sadd.s32 %s118, 1
      %p122 = scmp.eq.s32.totalorder %s21, 1
      %p123 = scmp.ne.s32.totalorder %s118, %s120
      %p124 = scmp.eq.s32.totalorder %s21, 0
      %p125 = por %p123, %p124
      %p126 = scmp.ne.s32.totalorder %s118, %s120
      %p127 = scmp.eq.s32.totalorder %s26, 1
      %p128 = por %p126, %p127
      %p129 = scmp.ne.s32.totalorder %s120, %s121
      %p130 = scmp.eq.s32.totalorder %s26, 0
      %p131 = por %p129, %p130
      %p132 = scmp.ne.s32.totalorder %s120, %s121
      %p133 = scmp.eq.s32.totalorder %s27, 1
      %p134 = por %p132, %p133
      %p136 = scmp.ne.s32.totalorder %s121, %s135
      %p137 = scmp.eq.s32.totalorder %s27, 0
      %p138 = por %p136, %p137
      %s140 = sadd.s32 %s139, 1
      %p143 = scmp.eq.s32.totalorder %s21, 1
      %p144 = scmp.ne.s32.totalorder %s139, %s141
      %p145 = scmp.eq.s32.totalorder %s21, 0
      %p146 = por %p144, %p145
      %p147 = scmp.ne.s32.totalorder %s139, %s141
      %p148 = scmp.eq.s32.totalorder %s26, 1
      %p149 = por %p147, %p148
      %p150 = scmp.ne.s32.totalorder %s141, %s142
      %p151 = scmp.eq.s32.totalorder %s26, 0
      %p152 = por %p150, %p151
      %p153 = scmp.ne.s32.totalorder %s141, %s142
      %p154 = scmp.eq.s32.totalorder %s27, 1
      %p155 = por %p153, %p154
      %p157 = scmp.ne.s32.totalorder %s142, %s156
      %p158 = scmp.eq.s32.totalorder %s27, 0
      %p159 = por %p157, %p158
      %s161 = sadd.s32 %s160, 1
      %p164 = scmp.eq.s32.totalorder %s21, 1
      %p165 = scmp.ne.s32.totalorder %s160, %s162
      %p166 = scmp.eq.s32.totalorder %s21, 0
      %p167 = por %p165, %p166
      %p168 = scmp.ne.s32.totalorder %s160, %s162
      %p169 = scmp.eq.s32.totalorder %s26, 1
      %p170 = por %p168, %p169
      %p171 = scmp.ne.s32.totalorder %s162, %s163
      %p172 = scmp.eq.s32.totalorder %s26, 0
      %p173 = por %p171, %p172
      %p174 = scmp.ne.s32.totalorder %s162, %s163
      %p175 = scmp.eq.s32.totalorder %s27, 1
      %p176 = por %p174, %p175
      %p178 = scmp.ne.s32.totalorder %s163, %s177
      %p179 = scmp.eq.s32.totalorder %s27, 0
      %p180 = por %p178, %p179
      %s181 = ssub.s32 %s21, %s28
      %p182 = scmp.eq.s32.totalorder %s181, 0
      %s184 = sadd.s32 %s183, 1
      %s185 = scalar_select %p182, %s183, %s184
      %p188 = pneg %p182
      %p189 = scmp.eq.s32.totalorder %s21, 1
      %p190 = por %p188, %p189
      %p191 = scmp.ne.s32.totalorder %s183, %s186
      %p192 = scmp.eq.s32.totalorder %s21, 0
      %p193 = por %p191, %p192
      %p194 = scmp.ne.s32.totalorder %s183, %s186
      %p195 = scmp.eq.s32.totalorder %s26, 1
      %p196 = por %p194, %p195
      %p197 = scmp.ne.s32.totalorder %s186, %s187
      %p198 = scmp.eq.s32.totalorder %s26, 0
      %p199 = por %p197, %p198
      %p200 = scmp.ne.s32.totalorder %s186, %s187
      %p201 = scmp.eq.s32.totalorder %s27, 1
      %p202 = por %p200, %p201
      %p204 = scmp.ne.s32.totalorder %s187, %s203
      %p205 = scmp.eq.s32.totalorder %s27, 0
      %p206 = por %p204, %p205
      %p207 = scmp.le.s32.totalorder 1, %s21
      %p208 = scmp.lt.s32.totalorder %s21, 3
      %p209 = pnand %p207, %p208
      %p210 = pneg %p209
      // Predicated region
      $region9: #{tpu_custom_call.1} parent=5 // pred_check
        _
      $region10: #{tpu_custom_call.1} parent=5 // pred_check_branch
        %212 = sbr.rel (%p209) target = $region12
      $region11: #{tpu_custom_call.1} parent=5 // pred_region
        %s213 = ssub.s32 %s21, 1
        // Predicated region
        $region13: #{tpu_custom_call.1} parent=11 // pred_check
          %p214 = pneg %p68
        $region14: #{tpu_custom_call.1} parent=11 // pred_check_branch
          %216 = sbr.rel (%p214) target = $region16
        $region15: #{tpu_custom_call.1} parent=11 // pred_region
          _
        $region16: #{tpu_custom_call.1} parent=11 // pred_fallthru
          _
        // Predicated region
        $region17: #{tpu_custom_call.1} parent=11 // pred_check
          %p217 = pneg %p89
        $region18: #{tpu_custom_call.1} parent=11 // pred_check_branch
          %219 = sbr.rel (%p217) target = $region20
        $region19: #{tpu_custom_call.1} parent=11 // pred_region
          _
        $region20: #{tpu_custom_call.1} parent=11 // pred_fallthru
          _
        // Predicated region
        $region21: #{tpu_custom_call.1} parent=11 // pred_check
          %p220 = pneg %p110
        $region22: #{tpu_custom_call.1} parent=11 // pred_check_branch
          %222 = sbr.rel (%p220) target = $region24
        $region23: #{tpu_custom_call.1} parent=11 // pred_region
          _
        $region24: #{tpu_custom_call.1} parent=11 // pred_fallthru
          _
        // Predicated region
        $region25: #{tpu_custom_call.1} parent=11 // pred_check
          %p223 = pneg %p131
        $region26: #{tpu_custom_call.1} parent=11 // pred_check_branch
          %225 = sbr.rel (%p223) target = $region28
        $region27: #{tpu_custom_call.1} parent=11 // pred_region
          _
        $region28: #{tpu_custom_call.1} parent=11 // pred_fallthru
          _
        // Predicated region
        $region29: #{tpu_custom_call.1} parent=11 // pred_check
          %p226 = pneg %p152
        $region30: #{tpu_custom_call.1} parent=11 // pred_check_branch
          %228 = sbr.rel (%p226) target = $region32
        $region31: #{tpu_custom_call.1} parent=11 // pred_region
          _
        $region32: #{tpu_custom_call.1} parent=11 // pred_fallthru
          _
        // Predicated region
        $region33: #{tpu_custom_call.1} parent=11 // pred_check
          %p229 = pneg %p173
        $region34: #{tpu_custom_call.1} parent=11 // pred_check_branch
          %231 = sbr.rel (%p229) target = $region36
        $region35: #{tpu_custom_call.1} parent=11 // pred_region
          _
        $region36: #{tpu_custom_call.1} parent=11 // pred_fallthru
          _
      $region12: #{tpu_custom_call.1} parent=5 // pred_fallthru
        _
      %p232 = scmp.lt.s32.totalorder %s21, 2
      // Predicated region
      $region37: #{tpu_custom_call.1} parent=5 // pred_check
        %p233 = pneg %p232
      $region38: #{tpu_custom_call.1} parent=5 // pred_check_branch
        %235 = sbr.rel (%p233) target = $region40
      $region39: #{tpu_custom_call.1} parent=5 // pred_region
        // Predicated region
        $region41: #{tpu_custom_call.1} parent=39 // pred_check
          %p236 = pneg %p41
        $region42: #{tpu_custom_call.1} parent=39 // pred_check_branch
          %238 = sbr.rel (%p236) target = $region44
        $region43: #{tpu_custom_call.1} parent=39 // pred_region
          %s239 = sand.u32 %s31, 1
          %s240 = scalar_lea.sflag [#allocation4], %s239
          %s241 = sand.u32 %s31, 1
          %s242 = smul.addr %s241, 64
          %s243 = scalar_lea.vmem [#allocation3], %s242
          %s245 = ssub.s32 1024, 1024
          %246 = vsyncadd %s240, %s245
          %s247 = smul.addr %s21, 8
          %s248 = smul.addr %s247, 128
          %s249 = scalar_lea.hbm %s0, %s248
          %s250 = sshll.u32 %s243, 4
          %s251 = int_to_ptr.vmem [resolvable:$true] %s250
          %256 = dma.hbm_to_vmem [thread:$0]  %s249, 1024, %s251, %s240, 256, 256, 16
        $region44: #{tpu_custom_call.1} parent=39 // pred_fallthru
          _
      $region40: #{tpu_custom_call.1} parent=5 // pred_fallthru
        _
      %p257 = scmp.le.s32.totalorder 1, %s21
      %p258 = scmp.lt.s32.totalorder %s21, 3
      %p259 = pnand %p257, %p258
      %p260 = pneg %p259
      // Predicated region
      $region45: #{tpu_custom_call.1} parent=5 // pred_check
        _
      $region46: #{tpu_custom_call.1} parent=5 // pred_check_branch
        %262 = sbr.rel (%p259) target = $region48
      $region47: #{tpu_custom_call.1} parent=5 // pred_region
        %s263 = ssub.s32 %s21, 1
        %s264 = sand.u32 %s34, 1
        %s265 = scalar_lea.sflag [#allocation4], %s264
        %s266 = sand.u32 %s34, 1
        %s267 = smul.addr %s266, 64
        %s268 = scalar_lea.vmem [#allocation3], %s267
        // Predicated region
        $region49: #{tpu_custom_call.1} parent=47 // pred_check
          %p269 = pneg %p47
        $region50: #{tpu_custom_call.1} parent=47 // pred_check_branch
          %271 = sbr.rel (%p269) target = $region52
        $region51: #{tpu_custom_call.1} parent=47 // pred_region
          %272 = dma.done %s265, 1024
        $region52: #{tpu_custom_call.1} parent=47 // pred_fallthru
          _
        %s273 = sand.u32 %s34, 1
        %s274 = scalar_lea.sflag [#allocation4], %s273
        %s275 = sand.u32 %s34, 1
        %s276 = smul.addr %s275, 64
        %s277 = scalar_lea.vmem [#allocation3], %s276
        %p278 = pneg %p47
        %p279 = pneg %p44
        %p280 = pneg %p68
        %p281 = pneg %p65
        %p282 = pneg %p89
        %p283 = pneg %p86
        %p284 = pneg %p110
        %p285 = pneg %p107
        %p286 = pneg %p131
        %p287 = pneg %p128
        %p288 = pneg %p152
        %p289 = pneg %p149
        %p290 = pneg %p173
        %p291 = pneg %p170
        %p292 = pneg %p199
        %p293 = pneg %p196
        %s294 = sand.u32 %s186, 1
        %s295 = scalar_lea.sflag [#allocation5], %s294
        %s296 = sand.u32 %s186, 1
        %s297 = smul.addr %s296, 64
        %s298 = scalar_lea.vmem [#allocation6], %s297
        %v299 = vld [vmem:[%s268] sm:$0xff]
        %v300 = vld [vmem:[%s268 + $0x8] sm:$0xff]
        %v301 = vld [vmem:[%s268 + $0x10] sm:$0xff]
        %v302 = vld [vmem:[%s268 + $0x18] sm:$0xff]
        %v303 = vld [vmem:[%s268 + $0x20] sm:$0xff]
        %v304 = vld [vmem:[%s268 + $0x28] sm:$0xff]
        %v305 = vld [vmem:[%s268 + $0x30] sm:$0xff]
        %v306 = vld [vmem:[%s268 + $0x38] sm:$0xff]
        %v307 = vld [vmem:[%s1] sm:$0x3]
        %v308 = vld [vmem:[%s3] sm:$0xff]
        %v309 = vld [vmem:[%s3 + $0x8] sm:$0xff]
        %v310 = vld [vmem:[%s3 + $0x10] sm:$0xff]
        %v311 = vld [vmem:[%s3 + $0x18] sm:$0xff]
        %v312 = vld [vmem:[%s5] sm:$0x1]
        %v313 = vadd.f32 %v299, %v300
        %314 = vadd.xlane.f32.xlu0 %v313
        %v315 = vpop.xlane.xlu0 %314
        %v316 = vadd.f32 %v301, %v302
        %317 = vadd.xlane.f32.xlu0 %v316
        %v318 = vpop.xlane.xlu0 %317
        %v319 = vadd.f32 %v303, %v304
        %320 = vadd.xlane.f32.xlu0 %v319
        %v321 = vpop.xlane.xlu0 %320
        %v322 = vadd.f32 %v305, %v306
        %323 = vadd.xlane.f32.xlu0 %v322
        %v324 = vpop.xlane.xlu0 %323
        %v325 = vmul.f32 %v315, 0.00390625
        %v326 = vmul.f32 %v318, 0.00390625
        %v327 = vmul.f32 %v321, 0.00390625
        %v328 = vmul.f32 %v324, 0.00390625
        %v329 = vld [vmem:[%s2] sm:$0x3]
        %vm330 = vcmask 261120
        %v332 = vsel %vm330, %v307, 0
        %334 = vmatprep.subr.mxu0 0.0
        %335 = vmatpush1.msra.mxu0 %v325
        %336 = vmatprep.subr.mxu0 0.0
        %337 = vmatpush1.msra.mxu0 %v326
        %338 = vmatprep.subr.mxu0 0.0
        %339 = vmatpush1.msra.mxu0 %v327
        %340 = vmatprep.subr.mxu0 0.0
        %341 = vmatpush1.msra.mxu0 %v328
        %342 = vmatprep.subr.mxu0 0.0
        %343 = vmatpush1.msra.mxu0 0.0
        %344 = vmatprep.subr.mxu0 0.0
        %345 = vmatpush1.msra.mxu0 0.0
        %346 = vmatprep.subr.mxu0 0.0
        %347 = vmatpush1.msra.mxu0 0.0
        %348 = vmatprep.subr.mxu0 0.0
        %349 = vmatpush1.msra.mxu0 0.0
        %350 = vmatprep.subr.mxu0 0.0
        %351 = vmatpush1.msra.mxu0 0.0
        %352 = vmatprep.subr.mxu0 0.0
        %353 = vmatpush1.msra.mxu0 0.0
        %354 = vmatprep.subr.mxu0 0.0
        %355 = vmatpush1.msra.mxu0 0.0
        %356 = vmatprep.subr.mxu0 0.0
        %357 = vmatpush1.msra.mxu0 0.0
        %358 = vmatprep.subr.mxu0 0.0
        %359 = vmatpush1.msra.mxu0 0.0
        %360 = vmatprep.subr.mxu0 0.0
        %361 = vmatpush1.msra.mxu0 0.0
        %362 = vmatprep.subr.mxu0 0.0
        %363 = vmatpush1.msra.mxu0 0.0
        %364 = vmatprep.subr.mxu0 0.0
        %365 = vmatpush1.msra.mxu0 0.0
        %366 = vmatprep.subr.mxu0 0.0
        %367 = vmatpush1.msra.mxu0 0.0
        %368 = vmatprep.subr.mxu0 0.0
        %369 = vmatpush1.msra.mxu0 0.0
        %370 = vmatprep.subr.mxu0 0.0
        %371 = vmatpush1.msra.mxu0 0.0
        %372 = vmatprep.subr.mxu0 0.0
        %373 = vmatpush1.msra.mxu0 0.0
        %374 = vmatprep.subr.mxu0 0.0
        %375 = vmatpush1.msra.mxu0 0.0
        %376 = vmatprep.subr.mxu0 0.0
        %377 = vmatpush1.msra.mxu0 0.0
        %378 = vmatprep.subr.mxu0 0.0
        %379 = vmatpush1.msra.mxu0 0.0
        %380 = vmatprep.subr.mxu0 0.0
        %381 = vmatpush1.msra.mxu0 0.0
        %382 = vmatprep.subr.mxu0 0.0
        %383 = vmatpush1.msra.mxu0 0.0
        %384 = vmatprep.subr.mxu0 0.0
        %385 = vmatpush1.msra.mxu0 0.0
        %386 = vmatprep.subr.mxu0 0.0
        %387 = vmatpush1.msra.mxu0 0.0
        %388 = vmatprep.subr.mxu0 0.0
        %389 = vmatpush1.msra.mxu0 0.0
        %390 = vmatprep.subr.mxu0 0.0
        %391 = vmatpush1.msra.mxu0 0.0
        %392 = vmatprep.subr.mxu0 0.0
        %393 = vmatpush1.msra.mxu0 0.0
        %394 = vmatprep.subr.mxu0 0.0
        %395 = vmatpush1.msra.mxu0 0.0
        %396 = vmatprep.subr.mxu0 0.0
        %397 = vmatpush1.msra.mxu0 0.0
        %398 = vmatprep.mubr.f32.mxu0 0.0
        %399 = vmatmul.mubr.f32.gmra.mrb[0].mxu0 %v332
        %v400 = vpop.f32.mrb[0].mxu0
        %v401 = vadd.f32 %v329, %v400
        %v402 = vpop.f32.mrb[0].mxu0
        %403 = vdwg.mxu0
        %v404 = vmax.f32 %v401, 0.0
        %v405 = vld [vmem:[%s4] sm:$0xff]
        %v406 = vld [vmem:[%s4 + $0x8] sm:$0xff]
        %v407 = vld [vmem:[%s4 + $0x10] sm:$0xff]
        %v408 = vld [vmem:[%s4 + $0x18] sm:$0xff]
        %vm409 = vcmask 15360
        %v411 = vsel %vm409, %v308, 0
        %v414 = vsel %vm409, %v309, 0
        %v417 = vsel %vm409, %v310, 0
        %v420 = vsel %vm409, %v311, 0
        %vm422 = vcmask 1041408
        %v424 = vsel %vm422, %v404, 0
        %426 = vmatprep.subr.mxu0 0.0
        %427 = vmatpush1.msra.mxu0 %v424
        %428 = vmatprep.subr.mxu0 0.0
        %429 = vmatpush1.msra.mxu0 0.0
        %430 = vmatprep.subr.mxu0 0.0
        %431 = vmatpush1.msra.mxu0 0.0
        %432 = vmatprep.subr.mxu0 0.0
        %433 = vmatpush1.msra.mxu0 0.0
        %434 = vmatprep.subr.mxu0 0.0
        %435 = vmatpush1.msra.mxu0 0.0
        %436 = vmatprep.subr.mxu0 0.0
        %437 = vmatpush1.msra.mxu0 0.0
        %438 = vmatprep.subr.mxu0 0.0
        %439 = vmatpush1.msra.mxu0 0.0
        %440 = vmatprep.subr.mxu0 0.0
        %441 = vmatpush1.msra.mxu0 0.0
        %442 = vmatprep.subr.mxu0 0.0
        %443 = vmatpush1.msra.mxu0 0.0
        %444 = vmatprep.subr.mxu0 0.0
        %445 = vmatpush1.msra.mxu0 0.0
        %446 = vmatprep.subr.mxu0 0.0
        %447 = vmatpush1.msra.mxu0 0.0
        %448 = vmatprep.subr.mxu0 0.0
        %449 = vmatpush1.msra.mxu0 0.0
        %450 = vmatprep.subr.mxu0 0.0
        %451 = vmatpush1.msra.mxu0 0.0
        %452 = vmatprep.subr.mxu0 0.0
        %453 = vmatpush1.msra.mxu0 0.0
        %454 = vmatprep.subr.mxu0 0.0
        %455 = vmatpush1.msra.mxu0 0.0
        %456 = vmatprep.subr.mxu0 0.0
        %457 = vmatpush1.msra.mxu0 0.0
        %458 = vmatprep.subr.mxu0 0.0
        %459 = vmatpush1.msra.mxu0 0.0
        %460 = vmatprep.subr.mxu0 0.0
        %461 = vmatpush1.msra.mxu0 0.0
        %462 = vmatprep.subr.mxu0 0.0
        %463 = vmatpush1.msra.mxu0 0.0
        %464 = vmatprep.subr.mxu0 0.0
        %465 = vmatpush1.msra.mxu0 0.0
        %466 = vmatprep.subr.mxu0 0.0
        %467 = vmatpush1.msra.mxu0 0.0
        %468 = vmatprep.subr.mxu0 0.0
        %469 = vmatpush1.msra.mxu0 0.0
        %470 = vmatprep.subr.mxu0 0.0
        %471 = vmatpush1.msra.mxu0 0.0
        %472 = vmatprep.subr.mxu0 0.0
        %473 = vmatpush1.msra.mxu0 0.0
        %474 = vmatprep.subr.mxu0 0.0
        %475 = vmatpush1.msra.mxu0 0.0
        %476 = vmatprep.subr.mxu0 0.0
        %477 = vmatpush1.msra.mxu0 0.0
        %478 = vmatprep.subr.mxu0 0.0
        %479 = vmatpush1.msra.mxu0 0.0
        %480 = vmatprep.subr.mxu0 0.0
        %481 = vmatpush1.msra.mxu0 0.0
        %482 = vmatprep.subr.mxu0 0.0
        %483 = vmatpush1.msra.mxu0 0.0
        %484 = vmatprep.subr.mxu0 0.0
        %485 = vmatpush1.msra.mxu0 0.0
        %486 = vmatprep.subr.mxu0 0.0
        %487 = vmatpush1.msra.mxu0 0.0
        %488 = vmatprep.subr.mxu0 0.0
        %489 = vmatpush1.msra.mxu0 0.0
        %490 = vmatprep.mubr.f32.mxu0 0.0
        %491 = vmatmul.mubr.f32.gmra.mrb[0].mxu0 %v411
        %v492 = vpop.f32.mrb[0].mxu0
        %v493 = vadd.f32 %v405, %v492
        %v494 = vpop.f32.mrb[0].mxu0
        %495 = vmatprep.mubr.f32.mxu0 0.0
        %496 = vmatmul.mubr.f32.gmra.mrb[0].mxu0 %v414
        %v497 = vpop.f32.mrb[0].mxu0
        %v498 = vadd.f32 %v406, %v497
        %v499 = vpop.f32.mrb[0].mxu0
        %500 = vmatprep.mubr.f32.mxu0 0.0
        %501 = vmatmul.mubr.f32.gmra.mrb[0].mxu0 %v417
        %v502 = vpop.f32.mrb[0].mxu0
        %v503 = vadd.f32 %v407, %v502
        %v504 = vpop.f32.mrb[0].mxu0
        %505 = vmatprep.mubr.f32.mxu0 0.0
        %506 = vmatmul.mubr.f32.gmra.mrb[0].mxu0 %v420
        %v507 = vpop.f32.mrb[0].mxu0
        %v508 = vadd.f32 %v408, %v507
        %v509 = vpop.f32.mrb[0].mxu0
        %510 = vdwg.mxu0
        %v511 = vxor.u32 %v493, 2147483648
        %v512 = vxor.u32 %v498, 2147483648
        %v513 = vxor.u32 %v503, 2147483648
        %v514 = vxor.u32 %v508, 2147483648
        %v515 = vmul.f32 %v511, 1.442695
        %v516 = vpow.pop %v515
        %v517 = vmul.f32 %v512, 1.442695
        %v518 = vpow.pop %v517
        %v519 = vmul.f32 %v513, 1.442695
        %v520 = vpow.pop %v519
        %v521 = vmul.f32 %v514, 1.442695
        %v522 = vpow.pop %v521
        %v523 = vadd.f32 %v516, 1.0
        %v524 = vadd.f32 %v518, 1.0
        %v525 = vadd.f32 %v520, 1.0
        %v526 = vadd.f32 %v522, 1.0
        %v527 = vrcp.pop %v523
        %v528 = vmul.f32 1.0, %v527
        %v529 = vrcp.pop %v524
        %v530 = vmul.f32 1.0, %v529
        %v531 = vrcp.pop %v525
        %v532 = vmul.f32 1.0, %v531
        %v533 = vrcp.pop %v526
        %v534 = vmul.f32 1.0, %v533
        %v535 = vld [vmem:[#allocation2] sm:$0x1]
        %537 = vset.pattern.permute.xlu0 0
        %538 = vperm.xlu0 %537, %v535
        %v539 = vpop.permute.xlu0 %538
        %v541 = vlaneseq
        %v542 = vshrl.u32 %v541, 7
        %v543 = vsub.s32 0, %v542
        %v544 = vrot.slane %v539, %v543
        %v546 = vsel %vm330, %v312, 0
        %548 = vmatprep.subr.mxu0 %v300
        %549 = vmatpush1.msra.mxu0 %v299
        %550 = vmatprep.subr.mxu0 %v302
        %551 = vmatpush1.msra.mxu0 %v301
        %552 = vmatprep.subr.mxu0 %v304
        %553 = vmatpush1.msra.mxu0 %v303
        %554 = vmatprep.subr.mxu0 %v306
        %555 = vmatpush1.msra.mxu0 %v305
        %556 = vmatprep.subr.mxu0 0.0
        %557 = vmatpush1.msra.mxu0 0.0
        %558 = vmatprep.subr.mxu0 0.0
        %559 = vmatpush1.msra.mxu0 0.0
        %560 = vmatprep.subr.mxu0 0.0
        %561 = vmatpush1.msra.mxu0 0.0
        %562 = vmatprep.subr.mxu0 0.0
        %563 = vmatpush1.msra.mxu0 0.0
        %564 = vmatprep.subr.mxu0 0.0
        %565 = vmatpush1.msra.mxu0 0.0
        %566 = vmatprep.subr.mxu0 0.0
        %567 = vmatpush1.msra.mxu0 0.0
        %568 = vmatprep.subr.mxu0 0.0
        %569 = vmatpush1.msra.mxu0 0.0
        %570 = vmatprep.subr.mxu0 0.0
        %571 = vmatpush1.msra.mxu0 0.0
        %572 = vmatprep.subr.mxu0 0.0
        %573 = vmatpush1.msra.mxu0 0.0
        %574 = vmatprep.subr.mxu0 0.0
        %575 = vmatpush1.msra.mxu0 0.0
        %576 = vmatprep.subr.mxu0 0.0
        %577 = vmatpush1.msra.mxu0 0.0
        %578 = vmatprep.subr.mxu0 0.0
        %579 = vmatpush1.msra.mxu0 0.0
        %580 = vmatprep.subr.mxu0 0.0
        %581 = vmatpush1.msra.mxu0 0.0
        %582 = vmatprep.subr.mxu0 0.0
        %583 = vmatpush1.msra.mxu0 0.0
        %584 = vmatprep.subr.mxu0 0.0
        %585 = vmatpush1.msra.mxu0 0.0
        %586 = vmatprep.subr.mxu0 0.0
        %587 = vmatpush1.msra.mxu0 0.0
        %588 = vmatprep.subr.mxu0 0.0
        %589 = vmatpush1.msra.mxu0 0.0
        %590 = vmatprep.subr.mxu0 0.0
        %591 = vmatpush1.msra.mxu0 0.0
        %592 = vmatprep.subr.mxu0 0.0
        %593 = vmatpush1.msra.mxu0 0.0
        %594 = vmatprep.subr.mxu0 0.0
        %595 = vmatpush1.msra.mxu0 0.0
        %596 = vmatprep.subr.mxu0 0.0
        %597 = vmatpush1.msra.mxu0 0.0
        %598 = vmatprep.subr.mxu0 0.0
        %599 = vmatpush1.msra.mxu0 0.0
        %600 = vmatprep.subr.mxu0 0.0
        %601 = vmatpush1.msra.mxu0 0.0
        %602 = vmatprep.subr.mxu0 0.0
        %603 = vmatpush1.msra.mxu0 0.0
        %604 = vmatprep.subr.mxu0 0.0
        %605 = vmatpush1.msra.mxu0 0.0
        %606 = vmatprep.subr.mxu0 0.0
        %607 = vmatpush1.msra.mxu0 0.0
        %608 = vmatprep.subr.mxu0 0.0
        %609 = vmatpush1.msra.mxu0 0.0
        %610 = vmatprep.subr.mxu0 0.0
        %611 = vmatpush1.msra.mxu0 0.0
        %612 = vmatprep.mubr.f32.mxu0 0.0
        %613 = vmatmul.mubr.f32.gmra.mrb[0].mxu0 %v546
        %v614 = vpop.f32.mrb[0].mxu0
        %v615 = vadd.f32 %v544, %v614
        %v616 = vpop.f32.mrb[0].mxu0
        %v617 = vadd.f32 %v544, %v616
        %618 = vdwg.mxu0
        %v619 = vxor.u32 %v615, 2147483648
        %v620 = vxor.u32 %v617, 2147483648
        %v621 = vmul.f32 %v619, 1.442695
        %v622 = vpow.pop %v621
        %v623 = vmul.f32 %v620, 1.442695
        %v624 = vpow.pop %v623
        %v625 = vadd.f32 %v622, 1.0
        %v626 = vadd.f32 %v624, 1.0
        %v627 = vrcp.pop %v625
        %v628 = vmul.f32 1.0, %v627
        %v629 = vrcp.pop %v626
        %v630 = vmul.f32 1.0, %v629
        %632 = vset.pattern.permute.xlu0 0
        %633 = vperm.xlu0 %632, %v528
        %v634 = vpop.permute.xlu0 %633
        %637 = vset.pattern.permute.xlu0 0
        %638 = vperm.xlu0 %637, %v530
        %v639 = vpop.permute.xlu0 %638
        %642 = vset.pattern.permute.xlu0 0
        %643 = vperm.xlu0 %642, %v532
        %v644 = vpop.permute.xlu0 %643
        %647 = vset.pattern.permute.xlu0 0
        %648 = vperm.xlu0 %647, %v534
        %v649 = vpop.permute.xlu0 %648
        %v651 = vlaneseq
        %v652 = vshrl.u32 %v651, 7
        %v653 = vsub.s32 0, %v652
        %v654 = vrot.slane %v628, %v653
        %v655 = vlaneseq
        %v656 = vshrl.u32 %v655, 7
        %v657 = vsub.s32 0, %v656
        %v658 = vrot.slane %v630, %v657
        %v659 = vadd.f32 %v634, %v654
        %v660 = vadd.f32 %v634, %v658
        %v661 = vadd.f32 %v639, %v654
        %v662 = vadd.f32 %v639, %v658
        %v663 = vadd.f32 %v644, %v654
        %v664 = vadd.f32 %v644, %v658
        %v665 = vadd.f32 %v649, %v654
        %v666 = vadd.f32 %v649, %v658
        %v667 = vmul.f32 %v299, %v659
        %v668 = vmul.f32 %v300, %v660
        %v669 = vmul.f32 %v301, %v661
        %v670 = vmul.f32 %v302, %v662
        %v671 = vmul.f32 %v303, %v663
        %v672 = vmul.f32 %v304, %v664
        %v673 = vmul.f32 %v305, %v665
        %v674 = vmul.f32 %v306, %v666
        %675 = vst [vmem:[%s298] sm:$0xff] %v667
        %676 = vst [vmem:[%s298 + $0x8] sm:$0xff] %v668
        %677 = vst [vmem:[%s298 + $0x10] sm:$0xff] %v669
        %678 = vst [vmem:[%s298 + $0x18] sm:$0xff] %v670
        %679 = vst [vmem:[%s298 + $0x20] sm:$0xff] %v671
        %680 = vst [vmem:[%s298 + $0x28] sm:$0xff] %v672
        %681 = vst [vmem:[%s298 + $0x30] sm:$0xff] %v673
        %682 = vst [vmem:[%s298 + $0x38] sm:$0xff] %v674
        %s683 = sand.u32 %s186, 1
        %s684 = scalar_lea.sflag [#allocation5], %s683
        %s685 = sand.u32 %s186, 1
        %s686 = smul.addr %s685, 64
        %s687 = scalar_lea.vmem [#allocation6], %s686
        // Predicated region
        $region53: #{tpu_custom_call.1} parent=47 // pred_check
          %p688 = pneg %p196
        $region54: #{tpu_custom_call.1} parent=47 // pred_check_branch
          %690 = sbr.rel (%p688) target = $region56
        $region55: #{tpu_custom_call.1} parent=47 // pred_region
          %s692 = ssub.s32 1024, 1024
          %693 = vsyncadd %s684, %s692
          %s694 = smul.addr %s26, 8
          %s695 = smul.addr %s694, 128
          %s696 = scalar_lea.hbm %s7, %s695
          %s697 = sshll.u32 %s687, 4
          %s698 = int_to_ptr.vmem [resolvable:$true] %s697
          %703 = dma.vmem_to_hbm [thread:$0]  %s698, 1024, %s696, %s684, 256, 256, 16
        $region56: #{tpu_custom_call.1} parent=47 // pred_fallthru
          _
      $region48: #{tpu_custom_call.1} parent=5 // pred_fallthru
        _
      %p704 = scmp.le.s32.totalorder 2, %s21
      // Predicated region
      $region57: #{tpu_custom_call.1} parent=5 // pred_check
        %p705 = pneg %p704
      $region58: #{tpu_custom_call.1} parent=5 // pred_check_branch
        %707 = sbr.rel (%p705) target = $region60
      $region59: #{tpu_custom_call.1} parent=5 // pred_region
        %s708 = ssub.s32 %s21, 2
        // Predicated region
        $region61: #{tpu_custom_call.1} parent=59 // pred_check
          %p709 = pneg %p202
        $region62: #{tpu_custom_call.1} parent=59 // pred_check_branch
          %711 = sbr.rel (%p709) target = $region64
        $region63: #{tpu_custom_call.1} parent=59 // pred_region
          %s712 = sand.u32 %s187, 1
          %s713 = scalar_lea.sflag [#allocation5], %s712
          %s714 = sand.u32 %s187, 1
          %s715 = smul.addr %s714, 64
          %s716 = scalar_lea.vmem [#allocation6], %s715
          %717 = dma.done %s713, 1024
        $region64: #{tpu_custom_call.1} parent=59 // pred_fallthru
          _
      $region60: #{tpu_custom_call.1} parent=5 // pred_fallthru
        _
    $region6: #{tpu_custom_call.1} parent=1 // loop_footer
      %s25 = sadd.s32 1, %s21
    $region7: #{tpu_custom_call.1} parent=1 // loop_footer_branch
      %20 = sbr.rel target = $region3
    $region8: #{tpu_custom_call.1} parent=1 // loop_exit
      _
    %718 = vsyncpa [#allocation4], 1
    %s719 = scalar_lea.sflag [#allocation4], 1
    %720 = vsyncpa %s719, 1
    %721 = vsyncpa [#allocation5], 1
    %s722 = scalar_lea.sflag [#allocation5], 1
    %723 = vsyncpa %s722, 1

</llo_original>
